<compile_context>
chip_gen: v7x
topology: tpu7x:2x2x1
jax: 0.10.0
libtpu: 0.0.40
codegen_flags: <defaults>
</compile_context>

<pallas_src>
import numpy as np
import jax
import jax.numpy as jnp
from jax.experimental import pallas as pl
from jax.experimental.pallas import tpu as pltpu

# SELU constants (match torch.nn.functional.selu).
SELU_ALPHA = 1.6732632423543772
SELU_SCALE = 1.0507009873554805


def _round_up(n, m):
    return ((n + m - 1) // m) * m


def _split_sizes(out_features, act_weight=(7.0, 7.0, 2.0)):
    # MonotonicLinear split (act_weight=(7,7,2), torch.round semantics):
    #   20 -> (9, 9, 2),   10 -> (4, 4, 2)
    total = float(sum(act_weight))
    s_conv = int(round(act_weight[0] / total * out_features))
    s_conc = int(round(act_weight[1] / total * out_features))
    return s_conv, s_conc, out_features - s_conv - s_conc


def _act_bounds(out_features):
    """Per-row clip bounds (lo, hi), each (out_features, 1) f32.

    Every activation MonotonicLinear uses (selu / concave selu / saturating selu with
    const=1) is "linear on [lo, hi], SELU exponential tail outside", and the tail offsets
    coincide with the bounds, so two per-row vectors describe all three row groups:
        convex rows:   [ 0, +inf)     selu(h)
        concave rows:  (-inf, 0]      -selu(-h)
        saturating:    [-1, +1]       saturating_func(h, const=1)
    """
    s_conv, s_conc, s_sat = _split_sizes(out_features)
    lo = np.concatenate([np.zeros(s_conv), np.full(s_conc, -np.inf), np.full(s_sat, -1.0)])
    hi = np.concatenate([np.full(s_conv, np.inf), np.zeros(s_conc), np.full(s_sat, 1.0)])
    return (jnp.asarray(lo.reshape(-1, 1), jnp.float32),
            jnp.asarray(hi.reshape(-1, 1), jnp.float32))


def _mono_act_unscaled(h, lo, hi):
    """Fused SELU-family activation WITHOUT the SELU scale (folded into the next layer).

    One EUP exp per element (was two): below the band (h - lo) and above it (hi - h) both
    equal -|d|, so the two tails share exp(-|d|).  The exp argument is always <= 0, so
    there is no overflow and no sentinel constant.
        d < 0 (h < lo): lo + ALPHA*(exp(h - lo) - 1)
        d > 0 (h > hi): hi - ALPHA*(exp(hi - h) - 1)
        d = 0         : h
    """
    t = jnp.clip(h, lo, hi)
    d = h - t
    e = SELU_ALPHA * (jnp.exp(-jnp.abs(d)) - 1.0)
    return t + jnp.where(d < 0.0, e, -e)


def _make_kernel(mxu_precision):
    def kernel(x_ref, w1_ref, b1_ref, lo1_ref, hi1_ref,
               w3_ref, b3_ref, lo3_ref, hi3_ref, w4_ref, out_ref):
        x = x_ref[...]                                      # (1, TB), batch on lanes

        # layer1: MonotonicLinear(1, 20).  K=1 -> VPU broadcast multiply (no degenerate
        # K=1 MXU matmul, no transpose).
        h1 = w1_ref[...] * x + b1_ref[...]                  # (20,1)*(1,TB)+(20,1) -> (20,TB)
        a1 = _mono_act_unscaled(h1, lo1_ref[...], hi1_ref[...])

        # layer3: MonotonicLinear(20, 10) -> the single real MXU matmul (no .T needed;
        # the SELU scale of a1 is pre-folded into w3).
        h3 = jnp.dot(w3_ref[...], a1, precision=mxu_precision,
                     preferred_element_type=jnp.float32) + b3_ref[...]
        a3 = _mono_act_unscaled(h3, lo3_ref[...], hi3_ref[...])   # (10, TB)

        # layer4: Linear(10, 1, bias=False).  N=1 -> VPU multiply + XLU sublane reduce.
        # (The MXU slot is idle, but after the 1-exp rewrite VALU/XLU have slack too,
        #  so this stays off the MXU as free filler.)
        out_ref[...] = jnp.sum(w4_ref[...] * a3, axis=0, keepdims=True)  # (1, TB)

    return kernel


def _default_core_parallel():
    """Only v7x has 2 TensorCores per chip; there CORE_PARALLEL actually splits the batch
    grid across cores (plain "parallel" does not change codegen).  v5e/v6e: single TC."""
    try:
        kind = jax.devices()[0].device_kind.lower()
    except Exception:
        return False
    return ("v7" in kind) or ("7x" in kind)


def toy_model_forward(x, params, tile_b=32768, core_parallel=None, mxu_precision=None):
    """x: (B, 1) float32 -> (B, 1) float32.  params follow the nn.Linear (out, in) convention.

    mxu_precision: optional lax.Precision for the layer-3 matmul (None = Mosaic default;
    the MXU is essentially idle here either way).
    """
    w1, b1, w3, b3, w4 = params
    B = x.shape[0]

    # Lane-dense batch tile (multiple of 128).  32K lanes amortize the ~0.35us/grid-step
    # pipeline overhead; the kernel needs ~0.4 KiB VMEM per lane (8-sublane-padded,
    # double-buffered (1,TB) I/O blocks plus the (20,TB)/(10,TB) intermediates), so 32K
    # fits a 32 MiB scoped limit on every generation.  v7x (64 MiB physical per TC):
    # keep TB <= 64K; v5e/v6e (128 MiB) may go larger, with the higher limit below.
    TB = min(_round_up(tile_b, 128), _round_up(B, 128))
    grid = (pl.cdiv(B, TB),)
    vmem_limit = (32 if TB <= 65536 else 64) * 1024 * 1024

    # (features, batch): batch on the lane axis.  No jnp.pad -- the ragged last block's
    # read and write DMAs are clipped by Pallas, so padding traffic is avoided entirely.
    x_t = x.astype(jnp.float32).reshape(1, B)

    # |W| computed once (all indicator entries are +1).  SELU_SCALE folded into the
    # *downstream* weights: w3 @ (SCALE*a1) == (SCALE*w3) @ a1, and likewise for w4, so
    # the in-kernel activation returns the unscaled piecewise value.
    w1a = jnp.abs(w1).astype(jnp.float32)                         # (20, 1)
    b1c = b1.astype(jnp.float32).reshape(-1, 1)                   # (20, 1)
    w3a = (SELU_SCALE * jnp.abs(w3)).astype(jnp.float32)          # (10, 20)
    b3c = b3.astype(jnp.float32).reshape(-1, 1)                   # (10, 1)
    w4t = (SELU_SCALE * w4).astype(jnp.float32).reshape(-1, 1)    # (10, 1) == scaled w4.T
    lo1, hi1 = _act_bounds(w1.shape[0])                           # (20, 1) each
    lo3, hi3 = _act_bounds(w3.shape[0])                           # (10, 1) each

    n_hidden = w1.shape[0] + w3.shape[0]                          # 30
    n_const = sum(a.size for a in (w1a, b1c, w3a, b3c, w4t, lo1, hi1, lo3, hi3))
    cost = pl.CostEstimate(
        flops=2 * B * (w1.shape[0] * w1.shape[1] + w3.shape[0] * w3.shape[1] + w4.shape[1]),
        transcendentals=B * n_hidden,          # one exp per hidden unit per batch element
        bytes_accessed=8 * B + 4 * n_const,
    )

    if core_parallel is None:
        core_parallel = _default_core_parallel()
    dim_sem = (pltpu.CORE_PARALLEL,) if core_parallel else ("parallel",)

    def const_spec(shape):
        # Full-array block at a constant index: stays VMEM-resident across the grid.
        return pl.BlockSpec(shape, lambda i: (0, 0))

    out_t = pl.pallas_call(
        _make_kernel(mxu_precision),
        out_shape=jax.ShapeDtypeStruct((1, B), jnp.float32),
        grid=grid,
        in_specs=[
            pl.BlockSpec((1, TB), lambda i: (0, i)),      # x tile: batch -> lanes
            const_spec(w1a.shape), const_spec(b1c.shape),
            const_spec(lo1.shape), const_spec(hi1.shape),
            const_spec(w3a.shape), const_spec(b3c.shape),
            const_spec(lo3.shape), const_spec(hi3.shape),
            const_spec(w4t.shape),
        ],
        out_specs=pl.BlockSpec((1, TB), lambda i: (0, i)),
        compiler_params=pltpu.CompilerParams(
            dimension_semantics=dim_sem,
            vmem_limit_bytes=vmem_limit,
        ),
        cost_estimate=cost,
    )(x_t, w1a, b1c, lo1, hi1, w3a, b3c, lo3, hi3, w4t)

    return out_t.reshape(B, 1)


# ----- pure-JAX reference (mirrors the PyTorch forward; matmuls forced to full f32) -----
_HIGHEST = jax.lax.Precision.HIGHEST


def _selu(v):
    return SELU_SCALE * jnp.where(v > 0, v, SELU_ALPHA * (jnp.exp(v) - 1.0))


def toy_model_reference(x, params):
    w1, b1, w3, b3, w4 = params

    def act_conc(v):
        return -_selu(-v)

    def act_sat(v, const=1.0, slope=1.0):
        conv = _selu(jnp.full_like(v, const))
        return slope * jnp.where(v <= 0.0, _selu(v + const) - conv, act_conc(v - const) + conv)

    def mono_layer(h_in, w, b):
        w = jnp.abs(w)                                     # all indicator entries are +1
        h = jnp.dot(h_in, w.T, precision=_HIGHEST) + b
        s_conv, s_conc, _ = _split_sizes(w.shape[0])
        return jnp.concatenate(
            [_selu(h[:, :s_conv]),
             act_conc(h[:, s_conv:s_conv + s_conc]),
             act_sat(h[:, s_conv + s_conc:])],
            axis=-1,
        )

    h = mono_layer(x, w1, b1)
    h = mono_layer(h, w3, b3)
    return jnp.dot(h, w4.T, precision=_HIGHEST)


def init_params(key):
    k1, k2, k3, k4, k5 = jax.random.split(key, 5)
    # nn.Linear convention: weight (out, in), bias (out,)
    w1 = jax.random.normal(k1, (20, 1), jnp.float32) * 0.5
    b1 = jax.random.normal(k2, (20,), jnp.float32) * 0.1
    w3 = jax.random.normal(k3, (10, 20), jnp.float32) * 0.3
    b3 = jax.random.normal(k4, (10,), jnp.float32) * 0.1
    w4 = jax.random.normal(k5, (1, 10), jnp.float32) * 0.3
    return (w1, b1, w3, b3, w4)


if __name__ == "__main__":
    key = jax.random.PRNGKey(0)
    kp, kx = jax.random.split(key)
    params = init_params(kp)

    batch = 1000   # mirrors the module's linspace(-10, 10, 1000).view(-1, 1) input
    x = jax.random.uniform(kx, (batch, 1), jnp.float32, minval=-10.0, maxval=10.0)

    # Small tile so this run exercises a multi-step batch grid AND the ragged last block
    # (1000 lanes = 3 full 256-lane tiles + one clipped tile); production uses the 32K default.
    out = jax.block_until_ready(toy_model_forward(x, params, tile_b=256))

    ref = toy_model_reference(x, params)
    assert out.shape == (batch, 1)
    # Observed error is ~1e-6 (all VPU/EUP math is exact f32 and Mosaic's f32 matmul runs
    # at full precision).  The bound is kept loose enough to also tolerate a jax build
    # that lowers default-precision f32 MXU matmuls through bf16 passes, while still
    # catching structural bugs (wrong split sizes / missing SELU scale / wrong tails),
    # which are O(0.5 .. 10) on this input range.
    assert jnp.allclose(out, ref, rtol=2e-3, atol=2e-1), float(jnp.max(jnp.abs(out - ref)))

    print("KERNEL_OK")
</pallas_src>

<mosaic_0001>
module attributes {stable_mosaic.version = 11 : i64} {
  func.func @kernel(%arg0: i32, %arg1: memref<1x256xf32, #tpu.memory_space<vmem>>, %arg2: memref<20x1xf32, #tpu.memory_space<vmem>>, %arg3: memref<20x1xf32, #tpu.memory_space<vmem>>, %arg4: memref<20x1xf32, #tpu.memory_space<vmem>>, %arg5: memref<20x1xf32, #tpu.memory_space<vmem>>, %arg6: memref<10x20xf32, #tpu.memory_space<vmem>>, %arg7: memref<10x1xf32, #tpu.memory_space<vmem>>, %arg8: memref<10x1xf32, #tpu.memory_space<vmem>>, %arg9: memref<10x1xf32, #tpu.memory_space<vmem>>, %arg10: memref<10x1xf32, #tpu.memory_space<vmem>>, %arg11: memref<1x256xf32, #tpu.memory_space<vmem>>) attributes {dimension_semantics = [#tpu.dimension_semantics<parallel>], iteration_bounds = array<i64: 4>, scalar_prefetch = 0 : i64, scratch_operands = 0 : i64, tpu.core_type = #tpu.core_type<tc>, window_params = [{transform_indices = @transform_0, window_bounds = array<i64: 1, 256>}, {pipeline_mode = #tpu.pipeline_mode<synchronous>, transform_indices = @transform_1, window_bounds = array<i64: 20, 1>}, {pipeline_mode = #tpu.pipeline_mode<synchronous>, transform_indices = @transform_2, window_bounds = array<i64: 20, 1>}, {pipeline_mode = #tpu.pipeline_mode<synchronous>, transform_indices = @transform_3, window_bounds = array<i64: 20, 1>}, {pipeline_mode = #tpu.pipeline_mode<synchronous>, transform_indices = @transform_4, window_bounds = array<i64: 20, 1>}, {pipeline_mode = #tpu.pipeline_mode<synchronous>, transform_indices = @transform_5, window_bounds = array<i64: 10, 20>}, {pipeline_mode = #tpu.pipeline_mode<synchronous>, transform_indices = @transform_6, window_bounds = array<i64: 10, 1>}, {pipeline_mode = #tpu.pipeline_mode<synchronous>, transform_indices = @transform_7, window_bounds = array<i64: 10, 1>}, {pipeline_mode = #tpu.pipeline_mode<synchronous>, transform_indices = @transform_8, window_bounds = array<i64: 10, 1>}, {pipeline_mode = #tpu.pipeline_mode<synchronous>, transform_indices = @transform_9, window_bounds = array<i64: 10, 1>}, {transform_indices = @transform_10, window_bounds = array<i64: 1, 256>}]} {
    %c0 = arith.constant 0 : index
    %c0_0 = arith.constant 0 : index
    %0 = vector.load %arg1[%c0, %c0_0] : memref<1x256xf32, #tpu.memory_space<vmem>>, vector<1x256xf32>
    %c0_1 = arith.constant 0 : index
    %c0_2 = arith.constant 0 : index
    %1 = vector.load %arg2[%c0_1, %c0_2] : memref<20x1xf32, #tpu.memory_space<vmem>>, vector<20x1xf32>
    %2 = vector.broadcast %1 : vector<20x1xf32> to vector<20x256xf32>
    %3 = vector.broadcast %0 : vector<1x256xf32> to vector<20x256xf32>
    %4 = arith.mulf %2, %3 : vector<20x256xf32>
    %c0_3 = arith.constant 0 : index
    %c0_4 = arith.constant 0 : index
    %5 = vector.load %arg3[%c0_3, %c0_4] : memref<20x1xf32, #tpu.memory_space<vmem>>, vector<20x1xf32>
    %6 = vector.broadcast %5 : vector<20x1xf32> to vector<20x256xf32>
    %7 = arith.addf %4, %6 : vector<20x256xf32>
    %c0_5 = arith.constant 0 : index
    %c0_6 = arith.constant 0 : index
    %8 = vector.load %arg4[%c0_5, %c0_6] : memref<20x1xf32, #tpu.memory_space<vmem>>, vector<20x1xf32>
    %c0_7 = arith.constant 0 : index
    %c0_8 = arith.constant 0 : index
    %9 = vector.load %arg5[%c0_7, %c0_8] : memref<20x1xf32, #tpu.memory_space<vmem>>, vector<20x1xf32>
    %10 = vector.broadcast %8 : vector<20x1xf32> to vector<20x256xf32>
    %11 = arith.maximumf %10, %7 : vector<20x256xf32>
    %12 = vector.broadcast %9 : vector<20x1xf32> to vector<20x256xf32>
    %13 = arith.minimumf %12, %11 : vector<20x256xf32>
    %14 = arith.subf %7, %13 : vector<20x256xf32>
    %15 = math.absf %14 : vector<20x256xf32>
    %cst = arith.constant 0.000000e+00 : f32
    %16 = vector.broadcast %cst : f32 to vector<20x256xf32>
    %17 = arith.subf %16, %15 : vector<20x256xf32>
    %18 = math.exp %17 : vector<20x256xf32>
    %cst_9 = arith.constant 1.000000e+00 : f32
    %19 = vector.broadcast %cst_9 : f32 to vector<20x256xf32>
    %20 = arith.subf %18, %19 : vector<20x256xf32>
    %cst_10 = arith.constant 1.67326319 : f32
    %21 = vector.broadcast %cst_10 : f32 to vector<20x256xf32>
    %22 = arith.mulf %21, %20 : vector<20x256xf32>
    %cst_11 = arith.constant 0.000000e+00 : f32
    %23 = vector.broadcast %cst_11 : f32 to vector<20x256xf32>
    %24 = arith.cmpf olt, %14, %23 : vector<20x256xf32>
    %cst_12 = arith.constant 0.000000e+00 : f32
    %25 = vector.broadcast %cst_12 : f32 to vector<20x256xf32>
    %26 = arith.subf %25, %22 : vector<20x256xf32>
    %27 = arith.select %24, %22, %26 : vector<20x256xi1>, vector<20x256xf32>
    %28 = arith.addf %13, %27 : vector<20x256xf32>
    %c0_13 = arith.constant 0 : index
    %c0_14 = arith.constant 0 : index
    %29 = vector.load %arg6[%c0_13, %c0_14] : memref<10x20xf32, #tpu.memory_space<vmem>>, vector<10x20xf32>
    %cst_15 = arith.constant dense<0.000000e+00> : vector<10x256xf32>
    %30 = tpu.matmul %29, %28, %cst_15 {dimension_numbers = #tpu.dot_dimension_numbers<[1], [0], [0], [1], [0, 0, 1, 1], [], []>} : vector<10x20xf32>, vector<20x256xf32>, vector<10x256xf32> -> vector<10x256xf32>
    %c0_16 = arith.constant 0 : index
    %c0_17 = arith.constant 0 : index
    %31 = vector.load %arg7[%c0_16, %c0_17] : memref<10x1xf32, #tpu.memory_space<vmem>>, vector<10x1xf32>
    %32 = vector.broadcast %31 : vector<10x1xf32> to vector<10x256xf32>
    %33 = arith.addf %30, %32 : vector<10x256xf32>
    %c0_18 = arith.constant 0 : index
    %c0_19 = arith.constant 0 : index
    %34 = vector.load %arg8[%c0_18, %c0_19] : memref<10x1xf32, #tpu.memory_space<vmem>>, vector<10x1xf32>
    %c0_20 = arith.constant 0 : index
    %c0_21 = arith.constant 0 : index
    %35 = vector.load %arg9[%c0_20, %c0_21] : memref<10x1xf32, #tpu.memory_space<vmem>>, vector<10x1xf32>
    %36 = vector.broadcast %34 : vector<10x1xf32> to vector<10x256xf32>
    %37 = arith.maximumf %36, %33 : vector<10x256xf32>
    %38 = vector.broadcast %35 : vector<10x1xf32> to vector<10x256xf32>
    %39 = arith.minimumf %38, %37 : vector<10x256xf32>
    %40 = arith.subf %33, %39 : vector<10x256xf32>
    %41 = math.absf %40 : vector<10x256xf32>
    %cst_22 = arith.constant 0.000000e+00 : f32
    %42 = vector.broadcast %cst_22 : f32 to vector<10x256xf32>
    %43 = arith.subf %42, %41 : vector<10x256xf32>
    %44 = math.exp %43 : vector<10x256xf32>
    %cst_23 = arith.constant 1.000000e+00 : f32
    %45 = vector.broadcast %cst_23 : f32 to vector<10x256xf32>
    %46 = arith.subf %44, %45 : vector<10x256xf32>
    %cst_24 = arith.constant 1.67326319 : f32
    %47 = vector.broadcast %cst_24 : f32 to vector<10x256xf32>
    %48 = arith.mulf %47, %46 : vector<10x256xf32>
    %cst_25 = arith.constant 0.000000e+00 : f32
    %49 = vector.broadcast %cst_25 : f32 to vector<10x256xf32>
    %50 = arith.cmpf olt, %40, %49 : vector<10x256xf32>
    %cst_26 = arith.constant 0.000000e+00 : f32
    %51 = vector.broadcast %cst_26 : f32 to vector<10x256xf32>
    %52 = arith.subf %51, %48 : vector<10x256xf32>
    %53 = arith.select %50, %48, %52 : vector<10x256xi1>, vector<10x256xf32>
    %54 = arith.addf %39, %53 : vector<10x256xf32>
    %c0_27 = arith.constant 0 : index
    %c0_28 = arith.constant 0 : index
    %55 = vector.load %arg10[%c0_27, %c0_28] : memref<10x1xf32, #tpu.memory_space<vmem>>, vector<10x1xf32>
    %56 = vector.broadcast %55 : vector<10x1xf32> to vector<10x256xf32>
    %57 = arith.mulf %56, %54 : vector<10x256xf32>
    %cst_29 = arith.constant dense<0.000000e+00> : vector<256xf32>
    %58 = vector.multi_reduction <add>, %57, %cst_29 [0] : vector<10x256xf32> to vector<256xf32>
    %59 = vector.shape_cast %58 : vector<256xf32> to vector<1x256xf32>
    %c0_30 = arith.constant 0 : index
    %c0_31 = arith.constant 0 : index
    %60 = vector.load %arg11[%c0_30, %c0_31] : memref<1x256xf32, #tpu.memory_space<vmem>>, vector<1x256xf32>
    tpu.vector_store %arg11[%c0_30, %c0_31], %59 {strides = array<i32>} : memref<1x256xf32, #tpu.memory_space<vmem>>, vector<1x256xf32>,
    return
  }
  func.func @transform_0(%arg0: i32) -> (i32, i32) {
    %c0_i32 = arith.constant 0 : i32
    %c0_i32_0 = arith.constant 0 : i32
    return %c0_i32, %arg0 : i32, i32
  }
  func.func @transform_1(%arg0: i32) -> (i32, i32) {
    %c0_i32 = arith.constant 0 : i32
    %c0_i32_0 = arith.constant 0 : i32
    %c0_i32_1 = arith.constant 0 : i32
    return %c0_i32, %c0_i32_0 : i32, i32
  }
  func.func @transform_2(%arg0: i32) -> (i32, i32) {
    %c0_i32 = arith.constant 0 : i32
    %c0_i32_0 = arith.constant 0 : i32
    %c0_i32_1 = arith.constant 0 : i32
    return %c0_i32, %c0_i32_0 : i32, i32
  }
  func.func @transform_3(%arg0: i32) -> (i32, i32) {
    %c0_i32 = arith.constant 0 : i32
    %c0_i32_0 = arith.constant 0 : i32
    %c0_i32_1 = arith.constant 0 : i32
    return %c0_i32, %c0_i32_0 : i32, i32
  }
  func.func @transform_4(%arg0: i32) -> (i32, i32) {
    %c0_i32 = arith.constant 0 : i32
    %c0_i32_0 = arith.constant 0 : i32
    %c0_i32_1 = arith.constant 0 : i32
    return %c0_i32, %c0_i32_0 : i32, i32
  }
  func.func @transform_5(%arg0: i32) -> (i32, i32) {
    %c0_i32 = arith.constant 0 : i32
    %c0_i32_0 = arith.constant 0 : i32
    %c0_i32_1 = arith.constant 0 : i32
    return %c0_i32, %c0_i32_0 : i32, i32
  }
  func.func @transform_6(%arg0: i32) -> (i32, i32) {
    %c0_i32 = arith.constant 0 : i32
    %c0_i32_0 = arith.constant 0 : i32
    %c0_i32_1 = arith.constant 0 : i32
    return %c0_i32, %c0_i32_0 : i32, i32
  }
  func.func @transform_7(%arg0: i32) -> (i32, i32) {
    %c0_i32 = arith.constant 0 : i32
    %c0_i32_0 = arith.constant 0 : i32
    %c0_i32_1 = arith.constant 0 : i32
    return %c0_i32, %c0_i32_0 : i32, i32
  }
  func.func @transform_8(%arg0: i32) -> (i32, i32) {
    %c0_i32 = arith.constant 0 : i32
    %c0_i32_0 = arith.constant 0 : i32
    %c0_i32_1 = arith.constant 0 : i32
    return %c0_i32, %c0_i32_0 : i32, i32
  }
  func.func @transform_9(%arg0: i32) -> (i32, i32) {
    %c0_i32 = arith.constant 0 : i32
    %c0_i32_0 = arith.constant 0 : i32
    %c0_i32_1 = arith.constant 0 : i32
    return %c0_i32, %c0_i32_0 : i32, i32
  }
  func.func @transform_10(%arg0: i32) -> (i32, i32) {
    %c0_i32 = arith.constant 0 : i32
    %c0_i32_0 = arith.constant 0 : i32
    return %c0_i32, %arg0 : i32, i32
  }
}

</mosaic_0001>

<llo_original>
// kernel: tpu_custom_call.1
$region0: #{tpu_custom_call.1}
  #allocation0 [shape = 'u32[]', space=smem, size = 0x4, offset = 0x4, fixed_abs, tag = 'smem constant byte address 0x4 - core index']
  #allocation1 [shape = 'u32[144,128]{1,0:T(1,128)}', space=vmem, size = 0x12000, scoped, tag = 'internal scratch']
  %s0 = inlined_call_operand.vmem [shape: f32[1,1000], index: 0, kind: input, shape index: {}]
  %s1 = inlined_call_operand.vmem [shape: f32[20,1], index: 1, kind: input, shape index: {}]
  %s2 = inlined_call_operand.vmem [shape: f32[20,1], index: 2, kind: input, shape index: {}]
  %s3 = inlined_call_operand.vmem [shape: f32[20,1], index: 3, kind: input, shape index: {}]
  %s4 = inlined_call_operand.vmem [shape: f32[20,1], index: 4, kind: input, shape index: {}]
  %s5 = inlined_call_operand.vmem [shape: f32[10,20], index: 5, kind: input, shape index: {}]
  %s6 = inlined_call_operand.vmem [shape: f32[10,1], index: 6, kind: input, shape index: {}]
  %s7 = inlined_call_operand.vmem [shape: f32[10,1], index: 7, kind: input, shape index: {}]
  %s8 = inlined_call_operand.vmem [shape: f32[10,1], index: 8, kind: input, shape index: {}]
  %s9 = inlined_call_operand.vmem [shape: f32[10,1], index: 9, kind: input, shape index: {}]
  %s10 = inlined_call_operand.hbm [shape: f32[1,1000], index: 10, kind: output, shape index: {}]
  %s11 = sld [smem:[#allocation0]]
  $region73: #{tpu_custom_call.1} parent=0
    _
  %s13 = ssub.s32 1, %s11
  %s14 = scalar_select 0, %s13, %s11
  $region1: #{tpu_custom_call.1} parent=0
    #allocation2 [shape = 'u8[2048]{0}', space=vmem, size = 0x800, scoped, tag = 'output window, operand 0']
    #allocation3 [shape = 's32[2]{0}', space=sflag, size = 0x8, scoped, tag = 'scoped memory for tpu_custom_call.1']
    %15 = vsyncpa [#allocation3], 0
    %s16 = scalar_lea.sflag [#allocation3], 1
    %17 = vsyncpa %s16, 0
    loop: start=0, step=1, limit=6
    $region2: #{tpu_custom_call.1} parent=1 // loop_pre_header
      _
    $region3: #{tpu_custom_call.1} parent=1 // loop_header
      %s19 = sphi 0, %s23
      %p20 = scmp.ge.s32.totalorder %s19, 6
      %s29 = sphi 0, %s31
      %s32 = sphi 0, %s29
      %s33 = sphi 0, %s32
      %s49 = sphi 0, %s33
      %s53 = sphi 0, %s53
      %s55 = sphi 0, %s53
      %s56 = sphi 0, %s55
      %s70 = sphi 0, %s56
      %s74 = sphi 0, %s74
      %s76 = sphi 0, %s74
      %s77 = sphi 0, %s76
      %s91 = sphi 0, %s77
      %s95 = sphi 0, %s95
      %s97 = sphi 0, %s95
      %s98 = sphi 0, %s97
      %s112 = sphi 0, %s98
      %s116 = sphi 0, %s116
      %s118 = sphi 0, %s116
      %s119 = sphi 0, %s118
      %s133 = sphi 0, %s119
      %s137 = sphi 0, %s137
      %s139 = sphi 0, %s137
      %s140 = sphi 0, %s139
      %s154 = sphi 0, %s140
      %s158 = sphi 0, %s158
      %s160 = sphi 0, %s158
      %s161 = sphi 0, %s160
      %s175 = sphi 0, %s161
      %s179 = sphi 0, %s179
      %s181 = sphi 0, %s179
      %s182 = sphi 0, %s181
      %s196 = sphi 0, %s182
      %s200 = sphi 0, %s200
      %s202 = sphi 0, %s200
      %s203 = sphi 0, %s202
      %s217 = sphi 0, %s203
      %s221 = sphi 0, %s221
      %s223 = sphi 0, %s221
      %s224 = sphi 0, %s223
      %s238 = sphi 0, %s224
      %s244 = sphi 0, %s246
      %s247 = sphi 0, %s244
      %s248 = sphi 0, %s247
      %s264 = sphi 0, %s248
    $region4: #{tpu_custom_call.1} parent=1 // loop_header_branch
      %22 = sbr.rel (%p20) target = $region8
    $region5: #{tpu_custom_call.1} parent=1 // loop_body
      %s24 = ssub.s32 %s19, 1
      %s25 = ssub.s32 %s19, 2
      %s26 = sadd.s32 %s19, 1
      %s27 = ssub.s32 %s19, %s26
      %p28 = scmp.eq.s32.totalorder %s27, 0
      %s30 = sadd.s32 %s29, 1
      %s31 = scalar_select %p28, %s29, %s30
      %p34 = pneg %p28
      %p35 = scmp.eq.s32.totalorder %s19, 3
      %p36 = por %p34, %p35
      %p37 = scmp.ne.s32.totalorder %s29, %s32
      %p38 = scmp.eq.s32.totalorder %s19, 0
      %p39 = por %p37, %p38
      %p40 = scmp.ne.s32.totalorder %s29, %s32
      %p41 = scmp.eq.s32.totalorder %s24, 3
      %p42 = por %p40, %p41
      %p43 = scmp.ne.s32.totalorder %s32, %s33
      %p44 = scmp.eq.s32.totalorder %s24, 0
      %p45 = por %p43, %p44
      %p46 = scmp.ne.s32.totalorder %s32, %s33
      %p47 = scmp.eq.s32.totalorder %s25, 3
      %p48 = por %p46, %p47
      %p50 = scmp.ne.s32.totalorder %s33, %s49
      %p51 = scmp.eq.s32.totalorder %s25, 0
      %p52 = por %p50, %p51
      %s54 = sadd.s32 %s53, 1
      %p57 = scmp.eq.s32.totalorder %s19, 3
      %p58 = scmp.ne.s32.totalorder %s53, %s55
      %p59 = scmp.eq.s32.totalorder %s19, 0
      %p60 = por %p58, %p59
      %p61 = scmp.ne.s32.totalorder %s53, %s55
      %p62 = scmp.eq.s32.totalorder %s24, 3
      %p63 = por %p61, %p62
      %p64 = scmp.ne.s32.totalorder %s55, %s56
      %p65 = scmp.eq.s32.totalorder %s24, 0
      %p66 = por %p64, %p65
      %p67 = scmp.ne.s32.totalorder %s55, %s56
      %p68 = scmp.eq.s32.totalorder %s25, 3
      %p69 = por %p67, %p68
      %p71 = scmp.ne.s32.totalorder %s56, %s70
      %p72 = scmp.eq.s32.totalorder %s25, 0
      %p73 = por %p71, %p72
      %s75 = sadd.s32 %s74, 1
      %p78 = scmp.eq.s32.totalorder %s19, 3
      %p79 = scmp.ne.s32.totalorder %s74, %s76
      %p80 = scmp.eq.s32.totalorder %s19, 0
      %p81 = por %p79, %p80
      %p82 = scmp.ne.s32.totalorder %s74, %s76
      %p83 = scmp.eq.s32.totalorder %s24, 3
      %p84 = por %p82, %p83
      %p85 = scmp.ne.s32.totalorder %s76, %s77
      %p86 = scmp.eq.s32.totalorder %s24, 0
      %p87 = por %p85, %p86
      %p88 = scmp.ne.s32.totalorder %s76, %s77
      %p89 = scmp.eq.s32.totalorder %s25, 3
      %p90 = por %p88, %p89
      %p92 = scmp.ne.s32.totalorder %s77, %s91
      %p93 = scmp.eq.s32.totalorder %s25, 0
      %p94 = por %p92, %p93
      %s96 = sadd.s32 %s95, 1
      %p99 = scmp.eq.s32.totalorder %s19, 3
      %p100 = scmp.ne.s32.totalorder %s95, %s97
      %p101 = scmp.eq.s32.totalorder %s19, 0
      %p102 = por %p100, %p101
      %p103 = scmp.ne.s32.totalorder %s95, %s97
      %p104 = scmp.eq.s32.totalorder %s24, 3
      %p105 = por %p103, %p104
      %p106 = scmp.ne.s32.totalorder %s97, %s98
      %p107 = scmp.eq.s32.totalorder %s24, 0
      %p108 = por %p106, %p107
      %p109 = scmp.ne.s32.totalorder %s97, %s98
      %p110 = scmp.eq.s32.totalorder %s25, 3
      %p111 = por %p109, %p110
      %p113 = scmp.ne.s32.totalorder %s98, %s112
      %p114 = scmp.eq.s32.totalorder %s25, 0
      %p115 = por %p113, %p114
      %s117 = sadd.s32 %s116, 1
      %p120 = scmp.eq.s32.totalorder %s19, 3
      %p121 = scmp.ne.s32.totalorder %s116, %s118
      %p122 = scmp.eq.s32.totalorder %s19, 0
      %p123 = por %p121, %p122
      %p124 = scmp.ne.s32.totalorder %s116, %s118
      %p125 = scmp.eq.s32.totalorder %s24, 3
      %p126 = por %p124, %p125
      %p127 = scmp.ne.s32.totalorder %s118, %s119
      %p128 = scmp.eq.s32.totalorder %s24, 0
      %p129 = por %p127, %p128
      %p130 = scmp.ne.s32.totalorder %s118, %s119
      %p131 = scmp.eq.s32.totalorder %s25, 3
      %p132 = por %p130, %p131
      %p134 = scmp.ne.s32.totalorder %s119, %s133
      %p135 = scmp.eq.s32.totalorder %s25, 0
      %p136 = por %p134, %p135
      %s138 = sadd.s32 %s137, 1
      %p141 = scmp.eq.s32.totalorder %s19, 3
      %p142 = scmp.ne.s32.totalorder %s137, %s139
      %p143 = scmp.eq.s32.totalorder %s19, 0
      %p144 = por %p142, %p143
      %p145 = scmp.ne.s32.totalorder %s137, %s139
      %p146 = scmp.eq.s32.totalorder %s24, 3
      %p147 = por %p145, %p146
      %p148 = scmp.ne.s32.totalorder %s139, %s140
      %p149 = scmp.eq.s32.totalorder %s24, 0
      %p150 = por %p148, %p149
      %p151 = scmp.ne.s32.totalorder %s139, %s140
      %p152 = scmp.eq.s32.totalorder %s25, 3
      %p153 = por %p151, %p152
      %p155 = scmp.ne.s32.totalorder %s140, %s154
      %p156 = scmp.eq.s32.totalorder %s25, 0
      %p157 = por %p155, %p156
      %s159 = sadd.s32 %s158, 1
      %p162 = scmp.eq.s32.totalorder %s19, 3
      %p163 = scmp.ne.s32.totalorder %s158, %s160
      %p164 = scmp.eq.s32.totalorder %s19, 0
      %p165 = por %p163, %p164
      %p166 = scmp.ne.s32.totalorder %s158, %s160
      %p167 = scmp.eq.s32.totalorder %s24, 3
      %p168 = por %p166, %p167
      %p169 = scmp.ne.s32.totalorder %s160, %s161
      %p170 = scmp.eq.s32.totalorder %s24, 0
      %p171 = por %p169, %p170
      %p172 = scmp.ne.s32.totalorder %s160, %s161
      %p173 = scmp.eq.s32.totalorder %s25, 3
      %p174 = por %p172, %p173
      %p176 = scmp.ne.s32.totalorder %s161, %s175
      %p177 = scmp.eq.s32.totalorder %s25, 0
      %p178 = por %p176, %p177
      %s180 = sadd.s32 %s179, 1
      %p183 = scmp.eq.s32.totalorder %s19, 3
      %p184 = scmp.ne.s32.totalorder %s179, %s181
      %p185 = scmp.eq.s32.totalorder %s19, 0
      %p186 = por %p184, %p185
      %p187 = scmp.ne.s32.totalorder %s179, %s181
      %p188 = scmp.eq.s32.totalorder %s24, 3
      %p189 = por %p187, %p188
      %p190 = scmp.ne.s32.totalorder %s181, %s182
      %p191 = scmp.eq.s32.totalorder %s24, 0
      %p192 = por %p190, %p191
      %p193 = scmp.ne.s32.totalorder %s181, %s182
      %p194 = scmp.eq.s32.totalorder %s25, 3
      %p195 = por %p193, %p194
      %p197 = scmp.ne.s32.totalorder %s182, %s196
      %p198 = scmp.eq.s32.totalorder %s25, 0
      %p199 = por %p197, %p198
      %s201 = sadd.s32 %s200, 1
      %p204 = scmp.eq.s32.totalorder %s19, 3
      %p205 = scmp.ne.s32.totalorder %s200, %s202
      %p206 = scmp.eq.s32.totalorder %s19, 0
      %p207 = por %p205, %p206
      %p208 = scmp.ne.s32.totalorder %s200, %s202
      %p209 = scmp.eq.s32.totalorder %s24, 3
      %p210 = por %p208, %p209
      %p211 = scmp.ne.s32.totalorder %s202, %s203
      %p212 = scmp.eq.s32.totalorder %s24, 0
      %p213 = por %p211, %p212
      %p214 = scmp.ne.s32.totalorder %s202, %s203
      %p215 = scmp.eq.s32.totalorder %s25, 3
      %p216 = por %p214, %p215
      %p218 = scmp.ne.s32.totalorder %s203, %s217
      %p219 = scmp.eq.s32.totalorder %s25, 0
      %p220 = por %p218, %p219
      %s222 = sadd.s32 %s221, 1
      %p225 = scmp.eq.s32.totalorder %s19, 3
      %p226 = scmp.ne.s32.totalorder %s221, %s223
      %p227 = scmp.eq.s32.totalorder %s19, 0
      %p228 = por %p226, %p227
      %p229 = scmp.ne.s32.totalorder %s221, %s223
      %p230 = scmp.eq.s32.totalorder %s24, 3
      %p231 = por %p229, %p230
      %p232 = scmp.ne.s32.totalorder %s223, %s224
      %p233 = scmp.eq.s32.totalorder %s24, 0
      %p234 = por %p232, %p233
      %p235 = scmp.ne.s32.totalorder %s223, %s224
      %p236 = scmp.eq.s32.totalorder %s25, 3
      %p237 = por %p235, %p236
      %p239 = scmp.ne.s32.totalorder %s224, %s238
      %p240 = scmp.eq.s32.totalorder %s25, 0
      %p241 = por %p239, %p240
      %s242 = ssub.s32 %s19, %s26
      %p243 = scmp.eq.s32.totalorder %s242, 0
      %s245 = sadd.s32 %s244, 1
      %s246 = scalar_select %p243, %s244, %s245
      %p249 = pneg %p243
      %p250 = scmp.eq.s32.totalorder %s19, 3
      %p251 = por %p249, %p250
      %p252 = scmp.ne.s32.totalorder %s244, %s247
      %p253 = scmp.eq.s32.totalorder %s19, 0
      %p254 = por %p252, %p253
      %p255 = scmp.ne.s32.totalorder %s244, %s247
      %p256 = scmp.eq.s32.totalorder %s24, 3
      %p257 = por %p255, %p256
      %p258 = scmp.ne.s32.totalorder %s247, %s248
      %p259 = scmp.eq.s32.totalorder %s24, 0
      %p260 = por %p258, %p259
      %p261 = scmp.ne.s32.totalorder %s247, %s248
      %p262 = scmp.eq.s32.totalorder %s25, 3
      %p263 = por %p261, %p262
      %p265 = scmp.ne.s32.totalorder %s248, %s264
      %p266 = scmp.eq.s32.totalorder %s25, 0
      %p267 = por %p265, %p266
      %p268 = scmp.le.s32.totalorder 1, %s19
      %p269 = scmp.lt.s32.totalorder %s19, 5
      %p270 = pnand %p268, %p269
      %p271 = pneg %p270
      // Predicated region
      $region9: #{tpu_custom_call.1} parent=5 // pred_check
        _
      $region10: #{tpu_custom_call.1} parent=5 // pred_check_branch
        %273 = sbr.rel (%p270) target = $region12
      $region11: #{tpu_custom_call.1} parent=5 // pred_region
        %s274 = ssub.s32 %s19, 1
        // Predicated region
        $region13: #{tpu_custom_call.1} parent=11 // pred_check
          %p275 = pneg %p66
        $region14: #{tpu_custom_call.1} parent=11 // pred_check_branch
          %277 = sbr.rel (%p275) target = $region16
        $region15: #{tpu_custom_call.1} parent=11 // pred_region
          _
        $region16: #{tpu_custom_call.1} parent=11 // pred_fallthru
          _
        // Predicated region
        $region17: #{tpu_custom_call.1} parent=11 // pred_check
          %p278 = pneg %p87
        $region18: #{tpu_custom_call.1} parent=11 // pred_check_branch
          %280 = sbr.rel (%p278) target = $region20
        $region19: #{tpu_custom_call.1} parent=11 // pred_region
          _
        $region20: #{tpu_custom_call.1} parent=11 // pred_fallthru
          _
        // Predicated region
        $region21: #{tpu_custom_call.1} parent=11 // pred_check
          %p281 = pneg %p108
        $region22: #{tpu_custom_call.1} parent=11 // pred_check_branch
          %283 = sbr.rel (%p281) target = $region24
        $region23: #{tpu_custom_call.1} parent=11 // pred_region
          _
        $region24: #{tpu_custom_call.1} parent=11 // pred_fallthru
          _
        // Predicated region
        $region25: #{tpu_custom_call.1} parent=11 // pred_check
          %p284 = pneg %p129
        $region26: #{tpu_custom_call.1} parent=11 // pred_check_branch
          %286 = sbr.rel (%p284) target = $region28
        $region27: #{tpu_custom_call.1} parent=11 // pred_region
          _
        $region28: #{tpu_custom_call.1} parent=11 // pred_fallthru
          _
        // Predicated region
        $region29: #{tpu_custom_call.1} parent=11 // pred_check
          %p287 = pneg %p150
        $region30: #{tpu_custom_call.1} parent=11 // pred_check_branch
          %289 = sbr.rel (%p287) target = $region32
        $region31: #{tpu_custom_call.1} parent=11 // pred_region
          _
        $region32: #{tpu_custom_call.1} parent=11 // pred_fallthru
          _
        // Predicated region
        $region33: #{tpu_custom_call.1} parent=11 // pred_check
          %p290 = pneg %p171
        $region34: #{tpu_custom_call.1} parent=11 // pred_check_branch
          %292 = sbr.rel (%p290) target = $region36
        $region35: #{tpu_custom_call.1} parent=11 // pred_region
          _
        $region36: #{tpu_custom_call.1} parent=11 // pred_fallthru
          _
        // Predicated region
        $region37: #{tpu_custom_call.1} parent=11 // pred_check
          %p293 = pneg %p192
        $region38: #{tpu_custom_call.1} parent=11 // pred_check_branch
          %295 = sbr.rel (%p293) target = $region40
        $region39: #{tpu_custom_call.1} parent=11 // pred_region
          _
        $region40: #{tpu_custom_call.1} parent=11 // pred_fallthru
          _
        // Predicated region
        $region41: #{tpu_custom_call.1} parent=11 // pred_check
          %p296 = pneg %p213
        $region42: #{tpu_custom_call.1} parent=11 // pred_check_branch
          %298 = sbr.rel (%p296) target = $region44
        $region43: #{tpu_custom_call.1} parent=11 // pred_region
          _
        $region44: #{tpu_custom_call.1} parent=11 // pred_fallthru
          _
        // Predicated region
        $region45: #{tpu_custom_call.1} parent=11 // pred_check
          %p299 = pneg %p234
        $region46: #{tpu_custom_call.1} parent=11 // pred_check_branch
          %301 = sbr.rel (%p299) target = $region48
        $region47: #{tpu_custom_call.1} parent=11 // pred_region
          _
        $region48: #{tpu_custom_call.1} parent=11 // pred_fallthru
          _
      $region12: #{tpu_custom_call.1} parent=5 // pred_fallthru
        _
      %p302 = scmp.lt.s32.totalorder %s19, 4
      // Predicated region
      $region49: #{tpu_custom_call.1} parent=5 // pred_check
        %p303 = pneg %p302
      $region50: #{tpu_custom_call.1} parent=5 // pred_check_branch
        %305 = sbr.rel (%p303) target = $region52
      $region51: #{tpu_custom_call.1} parent=5 // pred_region
        // Predicated region
        $region53: #{tpu_custom_call.1} parent=51 // pred_check
          %p306 = pneg %p39
        $region54: #{tpu_custom_call.1} parent=51 // pred_check_branch
          %308 = sbr.rel (%p306) target = $region56
        $region55: #{tpu_custom_call.1} parent=51 // pred_region
          %s309 = smul.u32 2, %s19
          %p310 = scmp.lt.s32.totalorder %s309, 7
          %s311 = scalar_select %p310, %s309, 7
          %s312 = scalar_lea.vmem %s0, %s311
          %s313 = smul.u32 2, %s19
        $region56: #{tpu_custom_call.1} parent=51 // pred_fallthru
          _
      $region52: #{tpu_custom_call.1} parent=5 // pred_fallthru
        _
      %p314 = scmp.le.s32.totalorder 1, %s19
      %p315 = scmp.lt.s32.totalorder %s19, 5
      %p316 = pnand %p314, %p315
      %p317 = pneg %p316
      // Predicated region
      $region57: #{tpu_custom_call.1} parent=5 // pred_check
        _
      $region58: #{tpu_custom_call.1} parent=5 // pred_check_branch
        %319 = sbr.rel (%p316) target = $region60
      $region59: #{tpu_custom_call.1} parent=5 // pred_region
        %s320 = ssub.s32 %s19, 1
        %s321 = smul.u32 2, %s24
        %p322 = scmp.lt.s32.totalorder %s321, 7
        %s323 = scalar_select %p322, %s321, 7
        %s324 = scalar_lea.vmem %s0, %s323
        %p325 = pneg %p45
        %p326 = pneg %p42
        %p327 = pneg %p66
        %p328 = pneg %p63
        %p329 = pneg %p87
        %p330 = pneg %p84
        %p331 = pneg %p108
        %p332 = pneg %p105
        %p333 = pneg %p129
        %p334 = pneg %p126
        %p335 = pneg %p150
        %p336 = pneg %p147
        %p337 = pneg %p171
        %p338 = pneg %p168
        %p339 = pneg %p192
        %p340 = pneg %p189
        %p341 = pneg %p213
        %p342 = pneg %p210
        %p343 = pneg %p234
        %p344 = pneg %p231
        %p345 = pneg %p260
        %p346 = pneg %p257
        %s347 = sand.u32 %s247, 1
        %s348 = scalar_lea.sflag [#allocation3], %s347
        %s349 = sand.u32 %s247, 1
        %s350 = smul.addr %s349, 2
        %s351 = scalar_lea.vmem [#allocation2], %s350
        %s352 = smul.u32 2, %s24
        %p353 = scmp.lt.s32.totalorder %s352, 7
        %s354 = scalar_select %p353, %s352, 7
        %s355 = scalar_lea.vmem %s0, %s354
        %s356 = smul.u32 2, %s24
        %s357 = smul.u32 2, %s24
        %v358 = vld [vmem:[%s355] sm:$0x3]
        %v359 = vld [vmem:[%s1] sm:$0xff]
        %v360 = vld [vmem:[%s1 + $0x8] sm:$0xff]
        %v361 = vld [vmem:[%s1 + $0x10] sm:$0xf]
        %363 = vset.pattern.permute.xlu0 0
        %364 = vperm.xlu0 %363, %v359
        %v365 = vpop.permute.xlu0 %364
        %368 = vset.pattern.permute.xlu0 0
        %369 = vperm.xlu0 %368, %v360
        %v370 = vpop.permute.xlu0 %369
        %373 = vset.pattern.permute.xlu0 0
        %374 = vperm.xlu0 %373, %v361
        %v375 = vpop.permute.xlu0 %374
        %v378 = vlaneseq
        %v379 = vshrl.u32 %v378, 7
        %v380 = vsub.s32 0, %v379
        %v381 = vrot.slane %v358, %v380
        %v382 = vlaneseq
        %v383 = vshrl.u32 %v382, 7
        %v384 = vsub.s32 1, %v383
        %v385 = vrot.slane %v358, %v384
        %v388 = vmul.f32 %v365, %v381
        %v389 = vmul.f32 %v365, %v385
        %v390 = vmul.f32 %v370, %v381
        %v391 = vmul.f32 %v370, %v385
        %v392 = vmul.f32 %v375, %v381
        %v393 = vmul.f32 %v375, %v385
        %v394 = vld [vmem:[%s2] sm:$0xff]
        %v395 = vld [vmem:[%s2 + $0x8] sm:$0xff]
        %v396 = vld [vmem:[%s2 + $0x10] sm:$0xf]
        %398 = vset.pattern.permute.xlu0 0
        %399 = vperm.xlu0 %398, %v394
        %v400 = vpop.permute.xlu0 %399
        %403 = vset.pattern.permute.xlu0 0
        %404 = vperm.xlu0 %403, %v395
        %v405 = vpop.permute.xlu0 %404
        %408 = vset.pattern.permute.xlu0 0
        %409 = vperm.xlu0 %408, %v396
        %v410 = vpop.permute.xlu0 %409
        %v412 = vadd.f32 %v388, %v400
        %v413 = vadd.f32 %v389, %v400
        %v414 = vadd.f32 %v390, %v405
        %v415 = vadd.f32 %v391, %v405
        %v416 = vadd.f32 %v392, %v410
        %v417 = vadd.f32 %v393, %v410
        %v418 = vld [vmem:[%s3] sm:$0xff]
        %v419 = vld [vmem:[%s3 + $0x8] sm:$0xff]
        %v420 = vld [vmem:[%s3 + $0x10] sm:$0xf]
        %v421 = vld [vmem:[%s4] sm:$0xff]
        %v422 = vld [vmem:[%s4 + $0x8] sm:$0xff]
        %v423 = vld [vmem:[%s4 + $0x10] sm:$0xf]
        %425 = vset.pattern.permute.xlu0 0
        %426 = vperm.xlu0 %425, %v418
        %v427 = vpop.permute.xlu0 %426
        %430 = vset.pattern.permute.xlu0 0
        %431 = vperm.xlu0 %430, %v419
        %v432 = vpop.permute.xlu0 %431
        %435 = vset.pattern.permute.xlu0 0
        %436 = vperm.xlu0 %435, %v420
        %v437 = vpop.permute.xlu0 %436
        %v439 = vmax.f32 %v427, %v412
        %v440 = vmax.f32 %v427, %v413
        %v441 = vmax.f32 %v432, %v414
        %v442 = vmax.f32 %v432, %v415
        %v443 = vmax.f32 %v437, %v416
        %v444 = vmax.f32 %v437, %v417
        %446 = vset.pattern.permute.xlu0 0
        %447 = vperm.xlu0 %446, %v421
        %v448 = vpop.permute.xlu0 %447
        %451 = vset.pattern.permute.xlu0 0
        %452 = vperm.xlu0 %451, %v422
        %v453 = vpop.permute.xlu0 %452
        %456 = vset.pattern.permute.xlu0 0
        %457 = vperm.xlu0 %456, %v423
        %v458 = vpop.permute.xlu0 %457
        %v460 = vmin.f32 %v448, %v439
        %v461 = vmin.f32 %v448, %v440
        %v462 = vmin.f32 %v453, %v441
        %v463 = vmin.f32 %v453, %v442
        %v464 = vmin.f32 %v458, %v443
        %v465 = vmin.f32 %v458, %v444
        %v466 = vsub.f32 %v412, %v460
        %v467 = vsub.f32 %v413, %v461
        %v468 = vsub.f32 %v414, %v462
        %v469 = vsub.f32 %v415, %v463
        %v470 = vsub.f32 %v416, %v464
        %v471 = vsub.f32 %v417, %v465
        %v472 = vand.u32 2147483647, %v466
        %v473 = vand.u32 2147483647, %v467
        %v474 = vand.u32 2147483647, %v468
        %v475 = vand.u32 2147483647, %v469
        %v476 = vand.u32 2147483647, %v470
        %v477 = vand.u32 2147483647, %v471
        %v478 = vsub.f32 0.0, %v472
        %v479 = vsub.f32 0.0, %v473
        %v480 = vsub.f32 0.0, %v474
        %v481 = vsub.f32 0.0, %v475
        %v482 = vsub.f32 0.0, %v476
        %v483 = vsub.f32 0.0, %v477
        %v484 = vmul.f32 %v478, 1.442695
        %v485 = vpow.pop %v484
        %v486 = vmul.f32 %v479, 1.442695
        %v487 = vpow.pop %v486
        %v488 = vmul.f32 %v480, 1.442695
        %v489 = vpow.pop %v488
        %v490 = vmul.f32 %v481, 1.442695
        %v491 = vpow.pop %v490
        %v492 = vmul.f32 %v482, 1.442695
        %v493 = vpow.pop %v492
        %v494 = vmul.f32 %v483, 1.442695
        %v495 = vpow.pop %v494
        %v496 = vsub.f32 %v485, 1.0
        %v497 = vsub.f32 %v487, 1.0
        %v498 = vsub.f32 %v489, 1.0
        %v499 = vsub.f32 %v491, 1.0
        %v500 = vsub.f32 %v493, 1.0
        %v501 = vsub.f32 %v495, 1.0
        %v502 = vmul.f32 %v496, 1.6732632
        %v503 = vmul.f32 %v497, 1.6732632
        %v504 = vmul.f32 %v498, 1.6732632
        %v505 = vmul.f32 %v499, 1.6732632
        %v506 = vmul.f32 %v500, 1.6732632
        %v507 = vmul.f32 %v501, 1.6732632
        %vm508 = vcmp.lt.f32.partialorder %v466, 0.0
        %vm509 = vcmp.lt.f32.partialorder %v467, 0.0
        %vm510 = vcmp.lt.f32.partialorder %v468, 0.0
        %vm511 = vcmp.lt.f32.partialorder %v469, 0.0
        %vm512 = vcmp.lt.f32.partialorder %v470, 0.0
        %vm513 = vcmp.lt.f32.partialorder %v471, 0.0
        %v514 = vsub.f32 0.0, %v502
        %v515 = vsub.f32 0.0, %v503
        %v516 = vsub.f32 0.0, %v504
        %v517 = vsub.f32 0.0, %v505
        %v518 = vsub.f32 0.0, %v506
        %v519 = vsub.f32 0.0, %v507
        %v520 = vsel %vm508, %v502, %v514
        %v521 = vsel %vm509, %v503, %v515
        %v522 = vsel %vm510, %v504, %v516
        %v523 = vsel %vm511, %v505, %v517
        %v524 = vsel %vm512, %v506, %v518
        %v525 = vsel %vm513, %v507, %v519
        %v526 = vadd.f32 %v460, %v520
        %v527 = vadd.f32 %v461, %v521
        %v528 = vadd.f32 %v462, %v522
        %v529 = vadd.f32 %v463, %v523
        %v530 = vadd.f32 %v464, %v524
        %v531 = vadd.f32 %v465, %v525
        %v532 = vld [vmem:[%s5] sm:$0xff]
        %v533 = vld [vmem:[%s5 + $0x8] sm:$0x3]
        %v534 = vld [vmem:[%s6] sm:$0xff]
        %v535 = vld [vmem:[%s6 + $0x8] sm:$0x3]
        %537 = vset.pattern.permute.xlu0 0
        %538 = vperm.xlu0 %537, %v534
        %v539 = vpop.permute.xlu0 %538
        %542 = vset.pattern.permute.xlu0 0
        %543 = vperm.xlu0 %542, %v535
        %v544 = vpop.permute.xlu0 %543
        %vm546 = vcmask 162816
        %v548 = vsel %vm546, %v532, 0
        %v551 = vsel %vm546, %v533, 0
        %vm553 = vcmask 1043456
        %v555 = vsel %vm553, %v530, 0
        %v558 = vsel %vm553, %v531, 0
        %560 = vmatprep.subr.mxu0 %v527
        %561 = vmatpush1.msra.mxu0 %v526
        %562 = vmatprep.subr.mxu0 %v529
        %563 = vmatpush1.msra.mxu0 %v528
        %564 = vmatprep.subr.mxu0 %v558
        %565 = vmatpush1.msra.mxu0 %v555
        %566 = vmatprep.subr.mxu0 0.0
        %567 = vmatpush1.msra.mxu0 0.0
        %568 = vmatprep.subr.mxu0 0.0
        %569 = vmatpush1.msra.mxu0 0.0
        %570 = vmatprep.subr.mxu0 0.0
        %571 = vmatpush1.msra.mxu0 0.0
        %572 = vmatprep.subr.mxu0 0.0
        %573 = vmatpush1.msra.mxu0 0.0
        %574 = vmatprep.subr.mxu0 0.0
        %575 = vmatpush1.msra.mxu0 0.0
        %576 = vmatprep.subr.mxu0 0.0
        %577 = vmatpush1.msra.mxu0 0.0
        %578 = vmatprep.subr.mxu0 0.0
        %579 = vmatpush1.msra.mxu0 0.0
        %580 = vmatprep.subr.mxu0 0.0
        %581 = vmatpush1.msra.mxu0 0.0
        %582 = vmatprep.subr.mxu0 0.0
        %583 = vmatpush1.msra.mxu0 0.0
        %584 = vmatprep.subr.mxu0 0.0
        %585 = vmatpush1.msra.mxu0 0.0
        %586 = vmatprep.subr.mxu0 0.0
        %587 = vmatpush1.msra.mxu0 0.0
        %588 = vmatprep.subr.mxu0 0.0
        %589 = vmatpush1.msra.mxu0 0.0
        %590 = vmatprep.subr.mxu0 0.0
        %591 = vmatpush1.msra.mxu0 0.0
        %592 = vmatprep.subr.mxu0 0.0
        %593 = vmatpush1.msra.mxu0 0.0
        %594 = vmatprep.subr.mxu0 0.0
        %595 = vmatpush1.msra.mxu0 0.0
        %596 = vmatprep.subr.mxu0 0.0
        %597 = vmatpush1.msra.mxu0 0.0
        %598 = vmatprep.subr.mxu0 0.0
        %599 = vmatpush1.msra.mxu0 0.0
        %600 = vmatprep.subr.mxu0 0.0
        %601 = vmatpush1.msra.mxu0 0.0
        %602 = vmatprep.subr.mxu0 0.0
        %603 = vmatpush1.msra.mxu0 0.0
        %604 = vmatprep.subr.mxu0 0.0
        %605 = vmatpush1.msra.mxu0 0.0
        %606 = vmatprep.subr.mxu0 0.0
        %607 = vmatpush1.msra.mxu0 0.0
        %608 = vmatprep.subr.mxu0 0.0
        %609 = vmatpush1.msra.mxu0 0.0
        %610 = vmatprep.subr.mxu0 0.0
        %611 = vmatpush1.msra.mxu0 0.0
        %612 = vmatprep.subr.mxu0 0.0
        %613 = vmatpush1.msra.mxu0 0.0
        %614 = vmatprep.subr.mxu0 0.0
        %615 = vmatpush1.msra.mxu0 0.0
        %616 = vmatprep.subr.mxu0 0.0
        %617 = vmatpush1.msra.mxu0 0.0
        %618 = vmatprep.subr.mxu0 0.0
        %619 = vmatpush1.msra.mxu0 0.0
        %620 = vmatprep.subr.mxu0 0.0
        %621 = vmatpush1.msra.mxu0 0.0
        %622 = vmatprep.subr.mxu0 0.0
        %623 = vmatpush1.msra.mxu0 0.0
        %624 = vmatprep.mubr.f32.mxu0 0.0
        %625 = vmatmul.mubr.f32.gmra.mrb[0].mxu0 %v548
        %v626 = vpop.f32.mrb[0].mxu0
        %v627 = vadd.f32 %v539, %v626
        %v628 = vpop.f32.mrb[0].mxu0
        %v629 = vadd.f32 %v539, %v628
        %630 = vmatprep.mubr.f32.mxu0 0.0
        %631 = vmatmul.mubr.f32.gmra.mrb[0].mxu0 %v551
        %v632 = vpop.f32.mrb[0].mxu0
        %v633 = vadd.f32 %v544, %v632
        %v634 = vpop.f32.mrb[0].mxu0
        %v635 = vadd.f32 %v544, %v634
        %636 = vdwg.mxu0
        %v637 = vld [vmem:[%s7] sm:$0xff]
        %v638 = vld [vmem:[%s7 + $0x8] sm:$0x3]
        %v639 = vld [vmem:[%s8] sm:$0xff]
        %v640 = vld [vmem:[%s8 + $0x8] sm:$0x3]
        %642 = vset.pattern.permute.xlu0 0
        %643 = vperm.xlu0 %642, %v637
        %v644 = vpop.permute.xlu0 %643
        %647 = vset.pattern.permute.xlu0 0
        %648 = vperm.xlu0 %647, %v638
        %v649 = vpop.permute.xlu0 %648
        %v651 = vmax.f32 %v644, %v627
        %v652 = vmax.f32 %v644, %v629
        %v653 = vmax.f32 %v649, %v633
        %v654 = vmax.f32 %v649, %v635
        %656 = vset.pattern.permute.xlu0 0
        %657 = vperm.xlu0 %656, %v639
        %v658 = vpop.permute.xlu0 %657
        %661 = vset.pattern.permute.xlu0 0
        %662 = vperm.xlu0 %661, %v640
        %v663 = vpop.permute.xlu0 %662
        %v665 = vmin.f32 %v658, %v651
        %v666 = vmin.f32 %v658, %v652
        %v667 = vmin.f32 %v663, %v653
        %v668 = vmin.f32 %v663, %v654
        %v669 = vsub.f32 %v627, %v665
        %v670 = vsub.f32 %v629, %v666
        %v671 = vsub.f32 %v633, %v667
        %v672 = vsub.f32 %v635, %v668
        %v673 = vand.u32 2147483647, %v669
        %v674 = vand.u32 2147483647, %v670
        %v675 = vand.u32 2147483647, %v671
        %v676 = vand.u32 2147483647, %v672
        %v677 = vsub.f32 0.0, %v673
        %v678 = vsub.f32 0.0, %v674
        %v679 = vsub.f32 0.0, %v675
        %v680 = vsub.f32 0.0, %v676
        %v681 = vmul.f32 %v677, 1.442695
        %v682 = vpow.pop %v681
        %v683 = vmul.f32 %v678, 1.442695
        %v684 = vpow.pop %v683
        %v685 = vmul.f32 %v679, 1.442695
        %v686 = vpow.pop %v685
        %v687 = vmul.f32 %v680, 1.442695
        %v688 = vpow.pop %v687
        %v689 = vsub.f32 %v682, 1.0
        %v690 = vsub.f32 %v684, 1.0
        %v691 = vsub.f32 %v686, 1.0
        %v692 = vsub.f32 %v688, 1.0
        %v693 = vmul.f32 %v689, 1.6732632
        %v694 = vmul.f32 %v690, 1.6732632
        %v695 = vmul.f32 %v691, 1.6732632
        %v696 = vmul.f32 %v692, 1.6732632
        %vm697 = vcmp.lt.f32.partialorder %v669, 0.0
        %vm698 = vcmp.lt.f32.partialorder %v670, 0.0
        %vm699 = vcmp.lt.f32.partialorder %v671, 0.0
        %vm700 = vcmp.lt.f32.partialorder %v672, 0.0
        %v701 = vsub.f32 0.0, %v693
        %v702 = vsub.f32 0.0, %v694
        %v703 = vsub.f32 0.0, %v695
        %v704 = vsub.f32 0.0, %v696
        %v705 = vsel %vm697, %v693, %v701
        %v706 = vsel %vm698, %v694, %v702
        %v707 = vsel %vm699, %v695, %v703
        %v708 = vsel %vm700, %v696, %v704
        %v709 = vadd.f32 %v665, %v705
        %v710 = vadd.f32 %v666, %v706
        %v711 = vadd.f32 %v667, %v707
        %v712 = vadd.f32 %v668, %v708
        %v713 = vld [vmem:[%s9] sm:$0xff]
        %v714 = vld [vmem:[%s9 + $0x8] sm:$0x3]
        %716 = vset.pattern.permute.xlu0 0
        %717 = vperm.xlu0 %716, %v713
        %v718 = vpop.permute.xlu0 %717
        %721 = vset.pattern.permute.xlu0 0
        %722 = vperm.xlu0 %721, %v714
        %v723 = vpop.permute.xlu0 %722
        %v725 = vmul.f32 %v718, %v709
        %v726 = vmul.f32 %v718, %v710
        %v727 = vmul.f32 %v723, %v711
        %v728 = vmul.f32 %v723, %v712
        %vm729 = vcmask 1041408
        %v730 = vsel %vm729, %v727, 0.0
        %v731 = vadd.f32 %v725, %v730
        %v732 = vrot.slane %v731, 4
        %v733 = vadd.f32 %v731, %v732
        %v734 = vrot.slane %v733, 2
        %v735 = vadd.f32 %v733, %v734
        %v736 = vrot.slane %v735, 1
        %v737 = vadd.f32 %v735, %v736
        %v738 = vsel %vm729, %v728, 0.0
        %v739 = vadd.f32 %v726, %v738
        %v740 = vrot.slane %v739, 4
        %v741 = vadd.f32 %v739, %v740
        %v742 = vrot.slane %v741, 2
        %v743 = vadd.f32 %v741, %v742
        %v744 = vrot.slane %v743, 1
        %v745 = vadd.f32 %v743, %v744
        %v748 = vcombine.low %v737, %v745
        %v750 = vunpack.c.l.s4 1966171168
        %v751 = vunpack.c.0.s8 %v750
        %v752 = vlaneseq
        %v753 = vshrl.u32 %v752, 7
        %v754 = vsub.s32 %v751, %v753
        %v755 = vrot.slane %v748, %v754
        %v757 = vunpack.c.l.s4 1966171168
        %v758 = vunpack.c.0.s8 %v757
        %v759 = vlaneseq
        %v760 = vshrl.u32 %v759, 7
        %v761 = vsub.s32 %v758, %v760
        %v762 = vrot.slane %v755, %v761
        %v764 = vlaneseq
        %vm765 = vcmp.ge.s32.totalorder %v764, 0
        %vm766 = vcmp.lt.s32.totalorder %v764, 256
        %vm767 = vmand %vm765, %vm766
        %768 = vst.msk [vmem:[%s351] sm:$0x3] %vm767, %v762
        %s769 = sand.u32 %s247, 1
        %s770 = scalar_lea.sflag [#allocation3], %s769
        %s771 = sand.u32 %s247, 1
        %s772 = smul.addr %s771, 2
        %s773 = scalar_lea.vmem [#allocation2], %s772
        // Predicated region
        $region61: #{tpu_custom_call.1} parent=59 // pred_check
          %p774 = pneg %p257
        $region62: #{tpu_custom_call.1} parent=59 // pred_check_branch
          %776 = sbr.rel (%p774) target = $region64
        $region63: #{tpu_custom_call.1} parent=59 // pred_region
          %s777 = smul.u32 2, %s24
          %s779 = ssub.s32 32, 32
          %780 = vsyncadd %s770, %s779
          %s781 = smul.addr %s777, 16
          %s782 = scalar_lea.hbm %s10, %s781
          %s784 = sshll.u32 %s773, 4
          %s785 = int_to_ptr.vmem [resolvable:$true] %s784
          %787 = dma.vmem_to_hbm [thread:$0]  %s785, 32, %s782, %s770
        $region64: #{tpu_custom_call.1} parent=59 // pred_fallthru
          _
      $region60: #{tpu_custom_call.1} parent=5 // pred_fallthru
        _
      %p788 = scmp.le.s32.totalorder 2, %s19
      // Predicated region
      $region65: #{tpu_custom_call.1} parent=5 // pred_check
        %p789 = pneg %p788
      $region66: #{tpu_custom_call.1} parent=5 // pred_check_branch
        %791 = sbr.rel (%p789) target = $region68
      $region67: #{tpu_custom_call.1} parent=5 // pred_region
        %s792 = ssub.s32 %s19, 2
        // Predicated region
        $region69: #{tpu_custom_call.1} parent=67 // pred_check
          %p793 = pneg %p263
        $region70: #{tpu_custom_call.1} parent=67 // pred_check_branch
          %795 = sbr.rel (%p793) target = $region72
        $region71: #{tpu_custom_call.1} parent=67 // pred_region
          %s796 = sand.u32 %s248, 1
          %s797 = scalar_lea.sflag [#allocation3], %s796
          %s798 = sand.u32 %s248, 1
          %s799 = smul.addr %s798, 2
          %s800 = scalar_lea.vmem [#allocation2], %s799
          %801 = dma.done %s797, 32
        $region72: #{tpu_custom_call.1} parent=67 // pred_fallthru
          _
      $region68: #{tpu_custom_call.1} parent=5 // pred_fallthru
        _
    $region6: #{tpu_custom_call.1} parent=1 // loop_footer
      %s23 = sadd.s32 1, %s19
    $region7: #{tpu_custom_call.1} parent=1 // loop_footer_branch
      %18 = sbr.rel target = $region3
    $region8: #{tpu_custom_call.1} parent=1 // loop_exit
      _
    %802 = vsyncpa [#allocation3], 1
    %s803 = scalar_lea.sflag [#allocation3], 1
    %804 = vsyncpa %s803, 1

</llo_original>
